<compile_context>
chip_gen: v7x
topology: tpu7x:2x2x1
jax: 0.10.0
libtpu: 0.0.40
codegen_flags: <defaults>
</compile_context>

<pallas_src>
import functools

import jax
import jax.numpy as jnp
from jax.experimental import pallas as pl
from jax.experimental.pallas import tpu as pltpu


# ----------------------------- kernels --------------------------------------


def _make_individual_kernel(tc, packed):
    """Per-channel Linear over a group of `tc` channels (one grid step).

    Refs:
      x_ref: (B, Tc, L_in)        -- channel-group slab of the original [B,C,L]
      w_ref: (Tc, L_in, L_out)
      b_ref: (1, Tc, L_out)
      o_ref: packed -> (B, Tc*L_out)  (single lane-dense store per step)
             else   -> (B, Tc, L_out)

    The statically-unrolled per-channel 2-D dots are the equivalent of
    einsum('bcl,clo->bco'); every matmul is a plain MXU 2-D contraction
    (no in-kernel batched dot / cross-sublane transpose needed).
    """

    def kernel(x_ref, w_ref, b_ref, o_ref):
        if packed:
            cols = []
            for c in range(tc):
                acc = jnp.dot(x_ref[:, c, :], w_ref[c],
                              preferred_element_type=jnp.float32)
                cols.append(acc + b_ref[:, c, :].astype(jnp.float32))
            out = cols[0] if tc == 1 else jnp.concatenate(cols, axis=-1)
            o_ref[...] = out.astype(o_ref.dtype)
        else:
            for c in range(tc):
                acc = jnp.dot(x_ref[:, c, :], w_ref[c],
                              preferred_element_type=jnp.float32)
                o_ref[:, c, :] = (acc
                                  + b_ref[:, c, :].astype(jnp.float32)
                                  ).astype(o_ref.dtype)

    return kernel


def _shared_linear_single_k_kernel(x_ref, w_ref, b_ref, o_ref):
    # Single K step: no scratch accumulator / no pl.when needed.
    # x_ref: (tm, K)  w_ref: (K, tn)  b_ref: (1, tn)  o_ref: (tm, tn)
    acc = jnp.dot(x_ref[...], w_ref[...], preferred_element_type=jnp.float32)
    o_ref[...] = (acc + b_ref[...].astype(jnp.float32)).astype(o_ref.dtype)


def _shared_linear_kernel(x_ref, w_ref, b_ref, o_ref, acc_ref):
    # x_ref: (tm, tk)  w_ref: (tk, tn)  b_ref: (1, tn)  o_ref: (tm, tn)
    # acc_ref: f32 VMEM scratch (tm, tn), resident across the K grid axis.
    @pl.when(pl.program_id(2) == 0)
    def _init():
        acc_ref[...] = jnp.zeros_like(acc_ref)

    acc_ref[...] += jnp.dot(x_ref[...], w_ref[...],
                            preferred_element_type=jnp.float32)

    @pl.when(pl.program_id(2) == pl.num_programs(2) - 1)
    def _finalize():
        o_ref[...] = (acc_ref[...]
                      + b_ref[...].astype(jnp.float32)).astype(o_ref.dtype)


# --------------------------- tile selection ----------------------------------


def _pick_channel_tile(C, B, L_in, L_out, itemsize):
    """Channels per grid step for the individual path.

    Budget ~8 MiB of double-buffered blocks (safe inside the 32 MiB scoped
    VMEM default on v5e/v6e/v7x); cap the static unroll length at 32.
    Must be a multiple of 8 (sublane tiling) unless it equals C.
    """
    budget = 8 * 1024 * 1024
    per_c = (B * L_in + L_in * L_out + L_out + B * L_out) * itemsize * 2
    tc = max(1, min(int(budget // max(per_c, 1)), 32))
    if C <= max(tc, 8):
        return C
    return max(8, (tc // 8) * 8)


def _pick_mn_tile(dim, pref, align):
    if dim <= pref:
        return dim
    return max((pref // align) * align, align)


def _pick_k_tile(K, pref=512):
    if K <= pref:
        return K
    for t in (pref, 256, 128):
        if K % t == 0:
            return t
    return K  # keep full K rather than contracting over padded garbage


# ----------------------------- wrappers -------------------------------------


@functools.partial(jax.jit, static_argnames=("individual",))
def block_model_forward(x, weight, bias, *, individual):
    """Forward pass of block_model.

    Args:
      x:      [B, C, L_in]
      weight: individual=True  -> [C, L_in, L_out]
              individual=False -> [L_in, L_out]
      bias:   individual=True  -> [C, L_out]
              individual=False -> [L_out]
    Returns:
      [B, C, L_out]
    """
    B, C, L_in = x.shape
    # TODO(synk): if inputs can be bf16, cast x/weight to bf16 here (f32 acc is
    # already used via preferred_element_type) to halve HBM traffic.
    if individual:
        L_out = weight.shape[-1]
        Tc = _pick_channel_tile(C, B, L_in, L_out, x.dtype.itemsize)
        # Lane-dense packed output is legal when the block equals the full
        # array or its lane width is a multiple of 128.
        packed = (Tc == C) or ((Tc * L_out) % 128 == 0)
        b3 = bias.reshape(1, C, L_out)
        grid = (pl.cdiv(C, Tc),)

        in_specs = [
            pl.BlockSpec((B, Tc, L_in), lambda c: (0, c, 0)),      # x (no transpose)
            pl.BlockSpec((Tc, L_in, L_out), lambda c: (c, 0, 0)),  # weights
            pl.BlockSpec((1, Tc, L_out), lambda c: (0, c, 0)),     # bias
        ]
        if packed:
            out_shape = jax.ShapeDtypeStruct((B, C * L_out), x.dtype)
            out_specs = pl.BlockSpec((B, Tc * L_out), lambda c: (0, c))
        else:
            out_shape = jax.ShapeDtypeStruct((B, C, L_out), x.dtype)
            out_specs = pl.BlockSpec((B, Tc, L_out), lambda c: (0, c, 0))

        out = pl.pallas_call(
            _make_individual_kernel(Tc, packed),
            out_shape=out_shape,
            grid_spec=pltpu.PrefetchScalarGridSpec(
                num_scalar_prefetch=0,
                grid=grid,
                in_specs=in_specs,
                out_specs=out_specs,
            ),
            compiler_params=pltpu.CompilerParams(
                dimension_semantics=("parallel",),
            ),
        )(x, weight, b3)
        return out.reshape(B, C, L_out)           # free reshape (contiguous)
    else:
        L_out = weight.shape[-1]
        M = B * C
        x2d = x.reshape(M, L_in)                  # free reshape (contiguous)
        b2 = bias.reshape(1, L_out)

        tm = _pick_mn_tile(M, 256, 8)
        tn = _pick_mn_tile(L_out, 256, 128)
        tk = _pick_k_tile(L_in)

        if tk >= L_in:
            # Single K step: simpler kernel, no scratch accumulator.
            grid = (pl.cdiv(M, tm), pl.cdiv(L_out, tn))
            out2d = pl.pallas_call(
                _shared_linear_single_k_kernel,
                out_shape=jax.ShapeDtypeStruct((M, L_out), x.dtype),
                grid_spec=pltpu.PrefetchScalarGridSpec(
                    num_scalar_prefetch=0,
                    grid=grid,
                    in_specs=[
                        pl.BlockSpec((tm, L_in), lambda i, j: (i, 0)),
                        pl.BlockSpec((L_in, tn), lambda i, j: (0, j)),
                        pl.BlockSpec((1, tn), lambda i, j: (0, j)),
                    ],
                    out_specs=pl.BlockSpec((tm, tn), lambda i, j: (i, j)),
                ),
                compiler_params=pltpu.CompilerParams(
                    dimension_semantics=("parallel", "parallel"),
                ),
            )(x2d, weight, b2)
        else:
            grid = (pl.cdiv(M, tm), pl.cdiv(L_out, tn), pl.cdiv(L_in, tk))
            out2d = pl.pallas_call(
                _shared_linear_kernel,
                out_shape=jax.ShapeDtypeStruct((M, L_out), x.dtype),
                grid_spec=pltpu.PrefetchScalarGridSpec(
                    num_scalar_prefetch=0,
                    grid=grid,
                    in_specs=[
                        pl.BlockSpec((tm, tk), lambda i, j, k: (i, k)),
                        pl.BlockSpec((tk, tn), lambda i, j, k: (k, j)),
                        pl.BlockSpec((1, tn), lambda i, j, k: (0, j)),
                    ],
                    out_specs=pl.BlockSpec((tm, tn), lambda i, j, k: (i, j)),
                    scratch_shapes=[pltpu.VMEM((tm, tn), jnp.float32)],
                ),
                compiler_params=pltpu.CompilerParams(
                    dimension_semantics=("parallel", "parallel", "arbitrary"),
                ),
            )(x2d, weight, b2)
        return out2d.reshape(B, C, L_out)


# ----------------------------- main -----------------------------------------


if __name__ == "__main__":
    key = jax.random.PRNGKey(0)
    B, C, L_in, L_out = 2, 4, 16, 32

    k_x, k_wi, k_bi, k_ws, k_bs = jax.random.split(key, 5)
    x = jax.random.normal(k_x, (B, C, L_in), dtype=jnp.float32)

    # deterministic "nn.Linear"-like params (scaled uniform), synthetic init
    bound = 1.0 / (L_in ** 0.5)
    # individual=True: one Linear(L_in, L_out) per channel
    w_ind = jax.random.uniform(k_wi, (C, L_in, L_out), jnp.float32, -bound, bound)
    b_ind = jax.random.uniform(k_bi, (C, L_out), jnp.float32, -bound, bound)
    # individual=False: shared Linear(L_in, L_out)
    w_sh = jax.random.uniform(k_ws, (L_in, L_out), jnp.float32, -bound, bound)
    b_sh = jax.random.uniform(k_bs, (L_out,), jnp.float32, -bound, bound)

    # --- individual=True path ---
    out_ind = block_model_forward(x, w_ind, b_ind, individual=True)
    jax.block_until_ready(out_ind)
    ref_ind = jnp.einsum("bcl,clo->bco", x, w_ind) + b_ind[None, :, :]
    assert out_ind.shape == (B, C, L_out)
    assert jnp.allclose(out_ind, ref_ind, atol=1e-5, rtol=1e-5)

    # --- individual=False path ---
    out_sh = block_model_forward(x, w_sh, b_sh, individual=False)
    jax.block_until_ready(out_sh)
    ref_sh = jnp.einsum("bcl,lo->bco", x, w_sh) + b_sh[None, None, :]
    assert out_sh.shape == (B, C, L_out)
    assert jnp.allclose(out_sh, ref_sh, atol=1e-5, rtol=1e-5)

    print("KERNEL_OK")
</pallas_src>

<mosaic_0001>
module attributes {stable_mosaic.version = 11 : i64} {
  func.func @kernel(%arg0: i32, %arg1: memref<2x4x16xf32, #tpu.memory_space<vmem>>, %arg2: memref<4x16x32xf32, #tpu.memory_space<vmem>>, %arg3: memref<1x4x32xf32, #tpu.memory_space<vmem>>, %arg4: memref<2x128xf32, #tpu.memory_space<vmem>>) attributes {dimension_semantics = [#tpu.dimension_semantics<parallel>], iteration_bounds = array<i64: 1>, scalar_prefetch = 0 : i64, scratch_operands = 0 : i64, tpu.core_type = #tpu.core_type<tc>, window_params = [{transform_indices = @transform_0, window_bounds = array<i64: 2, 4, 16>}, {transform_indices = @transform_1, window_bounds = array<i64: 4, 16, 32>}, {transform_indices = @transform_2, window_bounds = array<i64: 1, 4, 32>}, {transform_indices = @transform_3, window_bounds = array<i64: 2, 128>}]} {
    %c0 = arith.constant 0 : index
    %c0_0 = arith.constant 0 : index
    %c0_1 = arith.constant 0 : index
    %0 = vector.load %arg1[%c0, %c0_0, %c0_1] : memref<2x4x16xf32, #tpu.memory_space<vmem>>, vector<2x1x16xf32>
    %1 = vector.shape_cast %0 : vector<2x1x16xf32> to vector<2x16xf32>
    %c0_2 = arith.constant 0 : index
    %c0_3 = arith.constant 0 : index
    %c0_4 = arith.constant 0 : index
    %2 = vector.load %arg2[%c0_2, %c0_3, %c0_4] : memref<4x16x32xf32, #tpu.memory_space<vmem>>, vector<1x16x32xf32>
    %3 = vector.shape_cast %2 : vector<1x16x32xf32> to vector<16x32xf32>
    %cst = arith.constant dense<0.000000e+00> : vector<2x32xf32>
    %4 = tpu.matmul %1, %3, %cst {dimension_numbers = #tpu.dot_dimension_numbers<[1], [0], [0], [1], [0, 0, 1, 1], [], []>} : vector<2x16xf32>, vector<16x32xf32>, vector<2x32xf32> -> vector<2x32xf32>
    %c0_5 = arith.constant 0 : index
    %c0_6 = arith.constant 0 : index
    %c0_7 = arith.constant 0 : index
    %5 = vector.load %arg3[%c0_5, %c0_6, %c0_7] : memref<1x4x32xf32, #tpu.memory_space<vmem>>, vector<1x1x32xf32>
    %6 = vector.shape_cast %5 : vector<1x1x32xf32> to vector<1x32xf32>
    %7 = vector.broadcast %6 : vector<1x32xf32> to vector<2x32xf32>
    %8 = arith.addf %4, %7 : vector<2x32xf32>
    %c0_8 = arith.constant 0 : index
    %c1 = arith.constant 1 : index
    %c0_9 = arith.constant 0 : index
    %9 = vector.load %arg1[%c0_8, %c1, %c0_9] : memref<2x4x16xf32, #tpu.memory_space<vmem>>, vector<2x1x16xf32>
    %10 = vector.shape_cast %9 : vector<2x1x16xf32> to vector<2x16xf32>
    %c1_10 = arith.constant 1 : index
    %c0_11 = arith.constant 0 : index
    %c0_12 = arith.constant 0 : index
    %11 = vector.load %arg2[%c1_10, %c0_11, %c0_12] : memref<4x16x32xf32, #tpu.memory_space<vmem>>, vector<1x16x32xf32>
    %12 = vector.shape_cast %11 : vector<1x16x32xf32> to vector<16x32xf32>
    %cst_13 = arith.constant dense<0.000000e+00> : vector<2x32xf32>
    %13 = tpu.matmul %10, %12, %cst_13 {dimension_numbers = #tpu.dot_dimension_numbers<[1], [0], [0], [1], [0, 0, 1, 1], [], []>} : vector<2x16xf32>, vector<16x32xf32>, vector<2x32xf32> -> vector<2x32xf32>
    %c0_14 = arith.constant 0 : index
    %c1_15 = arith.constant 1 : index
    %c0_16 = arith.constant 0 : index
    %14 = vector.load %arg3[%c0_14, %c1_15, %c0_16] : memref<1x4x32xf32, #tpu.memory_space<vmem>>, vector<1x1x32xf32>
    %15 = vector.shape_cast %14 : vector<1x1x32xf32> to vector<1x32xf32>
    %16 = vector.broadcast %15 : vector<1x32xf32> to vector<2x32xf32>
    %17 = arith.addf %13, %16 : vector<2x32xf32>
    %c0_17 = arith.constant 0 : index
    %c2 = arith.constant 2 : index
    %c0_18 = arith.constant 0 : index
    %18 = vector.load %arg1[%c0_17, %c2, %c0_18] : memref<2x4x16xf32, #tpu.memory_space<vmem>>, vector<2x1x16xf32>
    %19 = vector.shape_cast %18 : vector<2x1x16xf32> to vector<2x16xf32>
    %c2_19 = arith.constant 2 : index
    %c0_20 = arith.constant 0 : index
    %c0_21 = arith.constant 0 : index
    %20 = vector.load %arg2[%c2_19, %c0_20, %c0_21] : memref<4x16x32xf32, #tpu.memory_space<vmem>>, vector<1x16x32xf32>
    %21 = vector.shape_cast %20 : vector<1x16x32xf32> to vector<16x32xf32>
    %cst_22 = arith.constant dense<0.000000e+00> : vector<2x32xf32>
    %22 = tpu.matmul %19, %21, %cst_22 {dimension_numbers = #tpu.dot_dimension_numbers<[1], [0], [0], [1], [0, 0, 1, 1], [], []>} : vector<2x16xf32>, vector<16x32xf32>, vector<2x32xf32> -> vector<2x32xf32>
    %c0_23 = arith.constant 0 : index
    %c2_24 = arith.constant 2 : index
    %c0_25 = arith.constant 0 : index
    %23 = vector.load %arg3[%c0_23, %c2_24, %c0_25] : memref<1x4x32xf32, #tpu.memory_space<vmem>>, vector<1x1x32xf32>
    %24 = vector.shape_cast %23 : vector<1x1x32xf32> to vector<1x32xf32>
    %25 = vector.broadcast %24 : vector<1x32xf32> to vector<2x32xf32>
    %26 = arith.addf %22, %25 : vector<2x32xf32>
    %c0_26 = arith.constant 0 : index
    %c3 = arith.constant 3 : index
    %c0_27 = arith.constant 0 : index
    %27 = vector.load %arg1[%c0_26, %c3, %c0_27] : memref<2x4x16xf32, #tpu.memory_space<vmem>>, vector<2x1x16xf32>
    %28 = vector.shape_cast %27 : vector<2x1x16xf32> to vector<2x16xf32>
    %c3_28 = arith.constant 3 : index
    %c0_29 = arith.constant 0 : index
    %c0_30 = arith.constant 0 : index
    %29 = vector.load %arg2[%c3_28, %c0_29, %c0_30] : memref<4x16x32xf32, #tpu.memory_space<vmem>>, vector<1x16x32xf32>
    %30 = vector.shape_cast %29 : vector<1x16x32xf32> to vector<16x32xf32>
    %cst_31 = arith.constant dense<0.000000e+00> : vector<2x32xf32>
    %31 = tpu.matmul %28, %30, %cst_31 {dimension_numbers = #tpu.dot_dimension_numbers<[1], [0], [0], [1], [0, 0, 1, 1], [], []>} : vector<2x16xf32>, vector<16x32xf32>, vector<2x32xf32> -> vector<2x32xf32>
    %c0_32 = arith.constant 0 : index
    %c3_33 = arith.constant 3 : index
    %c0_34 = arith.constant 0 : index
    %32 = vector.load %arg3[%c0_32, %c3_33, %c0_34] : memref<1x4x32xf32, #tpu.memory_space<vmem>>, vector<1x1x32xf32>
    %33 = vector.shape_cast %32 : vector<1x1x32xf32> to vector<1x32xf32>
    %34 = vector.broadcast %33 : vector<1x32xf32> to vector<2x32xf32>
    %35 = arith.addf %31, %34 : vector<2x32xf32>
    %36 = tpu.concatenate %8, %17, %26, %35 in 1 : vector<2x32xf32>, vector<2x32xf32>, vector<2x32xf32>, vector<2x32xf32> -> vector<2x128xf32>
    %c0_35 = arith.constant 0 : index
    %c0_36 = arith.constant 0 : index
    %37 = vector.load %arg4[%c0_35, %c0_36] : memref<2x128xf32, #tpu.memory_space<vmem>>, vector<2x128xf32>
    tpu.vector_store %arg4[%c0_35, %c0_36], %36 {strides = array<i32>} : memref<2x128xf32, #tpu.memory_space<vmem>>, vector<2x128xf32>,
    return
  }
  func.func @transform_0(%arg0: i32) -> (i32, i32, i32) {
    %c0_i32 = arith.constant 0 : i32
    %c0_i32_0 = arith.constant 0 : i32
    %c0_i32_1 = arith.constant 0 : i32
    return %c0_i32, %arg0, %c0_i32_0 : i32, i32, i32
  }
  func.func @transform_1(%arg0: i32) -> (i32, i32, i32) {
    %c0_i32 = arith.constant 0 : i32
    %c0_i32_0 = arith.constant 0 : i32
    %c0_i32_1 = arith.constant 0 : i32
    return %arg0, %c0_i32, %c0_i32_0 : i32, i32, i32
  }
  func.func @transform_2(%arg0: i32) -> (i32, i32, i32) {
    %c0_i32 = arith.constant 0 : i32
    %c0_i32_0 = arith.constant 0 : i32
    %c0_i32_1 = arith.constant 0 : i32
    return %c0_i32, %arg0, %c0_i32_0 : i32, i32, i32
  }
  func.func @transform_3(%arg0: i32) -> (i32, i32) {
    %c0_i32 = arith.constant 0 : i32
    %c0_i32_0 = arith.constant 0 : i32
    return %c0_i32, %arg0 : i32, i32
  }
}

</mosaic_0001>

<llo_original>
// kernel: block_model_forward.1
$region0: #{block_model_forward.1}
  #allocation0 [shape = 'u32[]', space=smem, size = 0x4, offset = 0x4, fixed_abs, tag = 'smem constant byte address 0x4 - core index']
  #allocation1 [shape = 'u32[144,128]{1,0:T(1,128)}', space=vmem, size = 0x12000, scoped, tag = 'internal scratch']
  %s0 = inlined_call_operand.hbm [shape: f32[2,4,16], index: 0, kind: input, shape index: {}]
  %s1 = inlined_call_operand.hbm [shape: f32[4,16,32], index: 1, kind: input, shape index: {}]
  %s2 = inlined_call_operand.vmem [shape: f32[1,4,32], index: 2, kind: input, shape index: {}]
  %s3 = inlined_call_operand.vmem [shape: f32[2,128], index: 3, kind: output, shape index: {}]
  %s4 = sld [smem:[#allocation0]]
  $region30: #{block_model_forward.1} parent=0
    _
  %s6 = ssub.s32 1, %s4
  %s7 = scalar_select 0, %s6, %s4
  $region1: #{block_model_forward.1} parent=0
    #allocation2 [shape = 'u8[4096]{0}', space=vmem, size = 0x1000, scoped, tag = 'input window, operand 0, single buffered']
    #allocation3 [shape = 's32[1]{0}', space=sflag, size = 0x4, scoped, tag = 'scoped memory for block_model_forward.1']
    #allocation4 [shape = 'u8[32768]{0}', space=vmem, size = 0x8000, scoped, tag = 'input window, operand 1, single buffered']
    #allocation5 [shape = 's32[1]{0}', space=sflag, size = 0x4, scoped, tag = 'scoped memory for block_model_forward.1']
    %8 = vsyncpa [#allocation3], 0
    %9 = vsyncpa [#allocation5], 0
    // Predicated region
    $region2: #{block_model_forward.1} parent=1 // pred_check
      _
    $region3: #{block_model_forward.1} parent=1 // pred_check_branch
      %11 = sbr.rel (0) target = $region5
    $region4: #{block_model_forward.1} parent=1 // pred_region
      %s13 = ssub.s32 128, 128
      %14 = vsyncadd [#allocation3], %s13
      %s15 = sshll.u32 [#allocation2], 4
      %s16 = int_to_ptr.vmem [resolvable:$true] %s15
      %21 = dma.hbm_to_vmem [thread:$0]  %s0, 128, %s16, [#allocation3], 64, 64, 4
    $region5: #{block_model_forward.1} parent=1 // pred_fallthru
      _
    // Predicated region
    $region6: #{block_model_forward.1} parent=1 // pred_check
      _
    $region7: #{block_model_forward.1} parent=1 // pred_check_branch
      %23 = sbr.rel (0) target = $region9
    $region8: #{block_model_forward.1} parent=1 // pred_region
      %s25 = ssub.s32 1024, 1024
      %26 = vsyncadd [#allocation5], %s25
      %s27 = sshll.u32 [#allocation4], 4
      %s28 = int_to_ptr.vmem [resolvable:$true] %s27
      %33 = dma.hbm_to_vmem [thread:$0]  %s1, 1024, %s28, [#allocation5], 128, 128, 8
    $region9: #{block_model_forward.1} parent=1 // pred_fallthru
      _
    // Predicated region
    $region10: #{block_model_forward.1} parent=1 // pred_check
      _
    $region11: #{block_model_forward.1} parent=1 // pred_check_branch
      %35 = sbr.rel (0) target = $region13
    $region12: #{block_model_forward.1} parent=1 // pred_region
      _
    $region13: #{block_model_forward.1} parent=1 // pred_fallthru
      _
    // Predicated region
    $region14: #{block_model_forward.1} parent=1 // pred_check
      _
    $region15: #{block_model_forward.1} parent=1 // pred_check_branch
      %37 = sbr.rel (0) target = $region17
    $region16: #{block_model_forward.1} parent=1 // pred_region
      %38 = dma.done [#allocation3], 128
    $region17: #{block_model_forward.1} parent=1 // pred_fallthru
      _
    // Predicated region
    $region18: #{block_model_forward.1} parent=1 // pred_check
      _
    $region19: #{block_model_forward.1} parent=1 // pred_check_branch
      %40 = sbr.rel (0) target = $region21
    $region20: #{block_model_forward.1} parent=1 // pred_region
      %41 = dma.done [#allocation5], 1024
    $region21: #{block_model_forward.1} parent=1 // pred_fallthru
      _
    %v42 = vld [vmem:[#allocation2] sm:$0x1]
    %v43 = vld [vmem:[#allocation2 + $0x4] sm:$0x1]
    %v44 = vld [vmem:[#allocation4] sm:$0xff]
    %v45 = vld [vmem:[#allocation4 + $0x8] sm:$0xff]
    %v46 = vld [vmem:[%s2] sm:$0x1]
    %v47 = vlaneseq
    %v48 = vshrl.u32 %v47, 7
    %v49 = vsub.s32 0, %v48
    %v50 = vrot.slane %v46, %v49
    %v53 = vrot.slane %v43, 7
    %vm54 = vcmask 1041409
    %v55 = vsel %vm54, %v53, %v42
    %vm56 = vcmask 130048
    %v57 = vsel %vm56, %v55, 0
    %59 = vmatprep.subr.mxu0 0.0
    %60 = vmatpush1.msra.mxu0 %v44
    %61 = vmatprep.subr.mxu0 0.0
    %62 = vmatpush1.msra.mxu0 %v45
    %63 = vmatprep.subr.mxu0 0.0
    %64 = vmatpush1.msra.mxu0 0.0
    %65 = vmatprep.subr.mxu0 0.0
    %66 = vmatpush1.msra.mxu0 0.0
    %67 = vmatprep.subr.mxu0 0.0
    %68 = vmatpush1.msra.mxu0 0.0
    %69 = vmatprep.subr.mxu0 0.0
    %70 = vmatpush1.msra.mxu0 0.0
    %71 = vmatprep.subr.mxu0 0.0
    %72 = vmatpush1.msra.mxu0 0.0
    %73 = vmatprep.subr.mxu0 0.0
    %74 = vmatpush1.msra.mxu0 0.0
    %75 = vmatprep.subr.mxu0 0.0
    %76 = vmatpush1.msra.mxu0 0.0
    %77 = vmatprep.subr.mxu0 0.0
    %78 = vmatpush1.msra.mxu0 0.0
    %79 = vmatprep.subr.mxu0 0.0
    %80 = vmatpush1.msra.mxu0 0.0
    %81 = vmatprep.subr.mxu0 0.0
    %82 = vmatpush1.msra.mxu0 0.0
    %83 = vmatprep.subr.mxu0 0.0
    %84 = vmatpush1.msra.mxu0 0.0
    %85 = vmatprep.subr.mxu0 0.0
    %86 = vmatpush1.msra.mxu0 0.0
    %87 = vmatprep.subr.mxu0 0.0
    %88 = vmatpush1.msra.mxu0 0.0
    %89 = vmatprep.subr.mxu0 0.0
    %90 = vmatpush1.msra.mxu0 0.0
    %91 = vmatprep.subr.mxu0 0.0
    %92 = vmatpush1.msra.mxu0 0.0
    %93 = vmatprep.subr.mxu0 0.0
    %94 = vmatpush1.msra.mxu0 0.0
    %95 = vmatprep.subr.mxu0 0.0
    %96 = vmatpush1.msra.mxu0 0.0
    %97 = vmatprep.subr.mxu0 0.0
    %98 = vmatpush1.msra.mxu0 0.0
    %99 = vmatprep.subr.mxu0 0.0
    %100 = vmatpush1.msra.mxu0 0.0
    %101 = vmatprep.subr.mxu0 0.0
    %102 = vmatpush1.msra.mxu0 0.0
    %103 = vmatprep.subr.mxu0 0.0
    %104 = vmatpush1.msra.mxu0 0.0
    %105 = vmatprep.subr.mxu0 0.0
    %106 = vmatpush1.msra.mxu0 0.0
    %107 = vmatprep.subr.mxu0 0.0
    %108 = vmatpush1.msra.mxu0 0.0
    %109 = vmatprep.subr.mxu0 0.0
    %110 = vmatpush1.msra.mxu0 0.0
    %111 = vmatprep.subr.mxu0 0.0
    %112 = vmatpush1.msra.mxu0 0.0
    %113 = vmatprep.subr.mxu0 0.0
    %114 = vmatpush1.msra.mxu0 0.0
    %115 = vmatprep.subr.mxu0 0.0
    %116 = vmatpush1.msra.mxu0 0.0
    %117 = vmatprep.subr.mxu0 0.0
    %118 = vmatpush1.msra.mxu0 0.0
    %119 = vmatprep.subr.mxu0 0.0
    %120 = vmatpush1.msra.mxu0 0.0
    %121 = vmatprep.subr.mxu0 0.0
    %122 = vmatpush1.msra.mxu0 0.0
    %123 = vmatprep.mubr.f32.mxu0 0.0
    %124 = vmatmul.mubr.f32.gmra.mrb[0].mxu0 %v57
    %v125 = vpop.f32.mrb[0].mxu0
    %v126 = vadd.f32 %v50, %v125
    %v127 = vpop.f32.mrb[0].mxu0
    %128 = vdwg.mxu0
    %v129 = vld [vmem:[#allocation2 + $0x1] sm:$0x1]
    %v130 = vld [vmem:[#allocation2 + $0x5] sm:$0x1]
    %s131 = scalar_lea.vmem [#allocation4], 16
    %v132 = vld [vmem:[%s131] sm:$0xff]
    %v133 = vld [vmem:[%s131 + $0x8] sm:$0xff]
    %v134 = vld [vmem:[%s2 + $0x1] sm:$0x1]
    %v135 = vlaneseq
    %v136 = vshrl.u32 %v135, 7
    %v137 = vsub.s32 0, %v136
    %v138 = vrot.slane %v134, %v137
    %v141 = vrot.slane %v130, 7
    %v142 = vsel %vm54, %v141, %v129
    %v143 = vsel %vm56, %v142, 0
    %145 = vmatprep.subr.mxu0 0.0
    %146 = vmatpush1.msra.mxu0 %v132
    %147 = vmatprep.subr.mxu0 0.0
    %148 = vmatpush1.msra.mxu0 %v133
    %149 = vmatprep.subr.mxu0 0.0
    %150 = vmatpush1.msra.mxu0 0.0
    %151 = vmatprep.subr.mxu0 0.0
    %152 = vmatpush1.msra.mxu0 0.0
    %153 = vmatprep.subr.mxu0 0.0
    %154 = vmatpush1.msra.mxu0 0.0
    %155 = vmatprep.subr.mxu0 0.0
    %156 = vmatpush1.msra.mxu0 0.0
    %157 = vmatprep.subr.mxu0 0.0
    %158 = vmatpush1.msra.mxu0 0.0
    %159 = vmatprep.subr.mxu0 0.0
    %160 = vmatpush1.msra.mxu0 0.0
    %161 = vmatprep.subr.mxu0 0.0
    %162 = vmatpush1.msra.mxu0 0.0
    %163 = vmatprep.subr.mxu0 0.0
    %164 = vmatpush1.msra.mxu0 0.0
    %165 = vmatprep.subr.mxu0 0.0
    %166 = vmatpush1.msra.mxu0 0.0
    %167 = vmatprep.subr.mxu0 0.0
    %168 = vmatpush1.msra.mxu0 0.0
    %169 = vmatprep.subr.mxu0 0.0
    %170 = vmatpush1.msra.mxu0 0.0
    %171 = vmatprep.subr.mxu0 0.0
    %172 = vmatpush1.msra.mxu0 0.0
    %173 = vmatprep.subr.mxu0 0.0
    %174 = vmatpush1.msra.mxu0 0.0
    %175 = vmatprep.subr.mxu0 0.0
    %176 = vmatpush1.msra.mxu0 0.0
    %177 = vmatprep.subr.mxu0 0.0
    %178 = vmatpush1.msra.mxu0 0.0
    %179 = vmatprep.subr.mxu0 0.0
    %180 = vmatpush1.msra.mxu0 0.0
    %181 = vmatprep.subr.mxu0 0.0
    %182 = vmatpush1.msra.mxu0 0.0
    %183 = vmatprep.subr.mxu0 0.0
    %184 = vmatpush1.msra.mxu0 0.0
    %185 = vmatprep.subr.mxu0 0.0
    %186 = vmatpush1.msra.mxu0 0.0
    %187 = vmatprep.subr.mxu0 0.0
    %188 = vmatpush1.msra.mxu0 0.0
    %189 = vmatprep.subr.mxu0 0.0
    %190 = vmatpush1.msra.mxu0 0.0
    %191 = vmatprep.subr.mxu0 0.0
    %192 = vmatpush1.msra.mxu0 0.0
    %193 = vmatprep.subr.mxu0 0.0
    %194 = vmatpush1.msra.mxu0 0.0
    %195 = vmatprep.subr.mxu0 0.0
    %196 = vmatpush1.msra.mxu0 0.0
    %197 = vmatprep.subr.mxu0 0.0
    %198 = vmatpush1.msra.mxu0 0.0
    %199 = vmatprep.subr.mxu0 0.0
    %200 = vmatpush1.msra.mxu0 0.0
    %201 = vmatprep.subr.mxu0 0.0
    %202 = vmatpush1.msra.mxu0 0.0
    %203 = vmatprep.subr.mxu0 0.0
    %204 = vmatpush1.msra.mxu0 0.0
    %205 = vmatprep.subr.mxu0 0.0
    %206 = vmatpush1.msra.mxu0 0.0
    %207 = vmatprep.subr.mxu0 0.0
    %208 = vmatpush1.msra.mxu0 0.0
    %209 = vmatprep.mubr.f32.mxu0 0.0
    %210 = vmatmul.mubr.f32.gmra.mrb[0].mxu0 %v143
    %v211 = vpop.f32.mrb[0].mxu0
    %v212 = vadd.f32 %v138, %v211
    %v213 = vpop.f32.mrb[0].mxu0
    %214 = vdwg.mxu0
    %v215 = vld [vmem:[#allocation2 + $0x2] sm:$0x1]
    %v216 = vld [vmem:[#allocation2 + $0x6] sm:$0x1]
    %s217 = scalar_lea.vmem [#allocation4], 32
    %v218 = vld [vmem:[%s217] sm:$0xff]
    %v219 = vld [vmem:[%s217 + $0x8] sm:$0xff]
    %v220 = vld [vmem:[%s2 + $0x2] sm:$0x1]
    %v221 = vlaneseq
    %v222 = vshrl.u32 %v221, 7
    %v223 = vsub.s32 0, %v222
    %v224 = vrot.slane %v220, %v223
    %v227 = vrot.slane %v216, 7
    %v228 = vsel %vm54, %v227, %v215
    %v229 = vsel %vm56, %v228, 0
    %231 = vmatprep.subr.mxu0 0.0
    %232 = vmatpush1.msra.mxu0 %v218
    %233 = vmatprep.subr.mxu0 0.0
    %234 = vmatpush1.msra.mxu0 %v219
    %235 = vmatprep.subr.mxu0 0.0
    %236 = vmatpush1.msra.mxu0 0.0
    %237 = vmatprep.subr.mxu0 0.0
    %238 = vmatpush1.msra.mxu0 0.0
    %239 = vmatprep.subr.mxu0 0.0
    %240 = vmatpush1.msra.mxu0 0.0
    %241 = vmatprep.subr.mxu0 0.0
    %242 = vmatpush1.msra.mxu0 0.0
    %243 = vmatprep.subr.mxu0 0.0
    %244 = vmatpush1.msra.mxu0 0.0
    %245 = vmatprep.subr.mxu0 0.0
    %246 = vmatpush1.msra.mxu0 0.0
    %247 = vmatprep.subr.mxu0 0.0
    %248 = vmatpush1.msra.mxu0 0.0
    %249 = vmatprep.subr.mxu0 0.0
    %250 = vmatpush1.msra.mxu0 0.0
    %251 = vmatprep.subr.mxu0 0.0
    %252 = vmatpush1.msra.mxu0 0.0
    %253 = vmatprep.subr.mxu0 0.0
    %254 = vmatpush1.msra.mxu0 0.0
    %255 = vmatprep.subr.mxu0 0.0
    %256 = vmatpush1.msra.mxu0 0.0
    %257 = vmatprep.subr.mxu0 0.0
    %258 = vmatpush1.msra.mxu0 0.0
    %259 = vmatprep.subr.mxu0 0.0
    %260 = vmatpush1.msra.mxu0 0.0
    %261 = vmatprep.subr.mxu0 0.0
    %262 = vmatpush1.msra.mxu0 0.0
    %263 = vmatprep.subr.mxu0 0.0
    %264 = vmatpush1.msra.mxu0 0.0
    %265 = vmatprep.subr.mxu0 0.0
    %266 = vmatpush1.msra.mxu0 0.0
    %267 = vmatprep.subr.mxu0 0.0
    %268 = vmatpush1.msra.mxu0 0.0
    %269 = vmatprep.subr.mxu0 0.0
    %270 = vmatpush1.msra.mxu0 0.0
    %271 = vmatprep.subr.mxu0 0.0
    %272 = vmatpush1.msra.mxu0 0.0
    %273 = vmatprep.subr.mxu0 0.0
    %274 = vmatpush1.msra.mxu0 0.0
    %275 = vmatprep.subr.mxu0 0.0
    %276 = vmatpush1.msra.mxu0 0.0
    %277 = vmatprep.subr.mxu0 0.0
    %278 = vmatpush1.msra.mxu0 0.0
    %279 = vmatprep.subr.mxu0 0.0
    %280 = vmatpush1.msra.mxu0 0.0
    %281 = vmatprep.subr.mxu0 0.0
    %282 = vmatpush1.msra.mxu0 0.0
    %283 = vmatprep.subr.mxu0 0.0
    %284 = vmatpush1.msra.mxu0 0.0
    %285 = vmatprep.subr.mxu0 0.0
    %286 = vmatpush1.msra.mxu0 0.0
    %287 = vmatprep.subr.mxu0 0.0
    %288 = vmatpush1.msra.mxu0 0.0
    %289 = vmatprep.subr.mxu0 0.0
    %290 = vmatpush1.msra.mxu0 0.0
    %291 = vmatprep.subr.mxu0 0.0
    %292 = vmatpush1.msra.mxu0 0.0
    %293 = vmatprep.subr.mxu0 0.0
    %294 = vmatpush1.msra.mxu0 0.0
    %295 = vmatprep.mubr.f32.mxu0 0.0
    %296 = vmatmul.mubr.f32.gmra.mrb[0].mxu0 %v229
    %v297 = vpop.f32.mrb[0].mxu0
    %v298 = vadd.f32 %v224, %v297
    %v299 = vpop.f32.mrb[0].mxu0
    %300 = vdwg.mxu0
    %v301 = vld [vmem:[#allocation2 + $0x3] sm:$0x1]
    %v302 = vld [vmem:[#allocation2 + $0x7] sm:$0x1]
    %s303 = scalar_lea.vmem [#allocation4], 48
    %v304 = vld [vmem:[%s303] sm:$0xff]
    %v305 = vld [vmem:[%s303 + $0x8] sm:$0xff]
    %v306 = vld [vmem:[%s2 + $0x3] sm:$0x1]
    %v307 = vlaneseq
    %v308 = vshrl.u32 %v307, 7
    %v309 = vsub.s32 0, %v308
    %v310 = vrot.slane %v306, %v309
    %v313 = vrot.slane %v302, 7
    %v314 = vsel %vm54, %v313, %v301
    %v315 = vsel %vm56, %v314, 0
    %317 = vmatprep.subr.mxu0 0.0
    %318 = vmatpush1.msra.mxu0 %v304
    %319 = vmatprep.subr.mxu0 0.0
    %320 = vmatpush1.msra.mxu0 %v305
    %321 = vmatprep.subr.mxu0 0.0
    %322 = vmatpush1.msra.mxu0 0.0
    %323 = vmatprep.subr.mxu0 0.0
    %324 = vmatpush1.msra.mxu0 0.0
    %325 = vmatprep.subr.mxu0 0.0
    %326 = vmatpush1.msra.mxu0 0.0
    %327 = vmatprep.subr.mxu0 0.0
    %328 = vmatpush1.msra.mxu0 0.0
    %329 = vmatprep.subr.mxu0 0.0
    %330 = vmatpush1.msra.mxu0 0.0
    %331 = vmatprep.subr.mxu0 0.0
    %332 = vmatpush1.msra.mxu0 0.0
    %333 = vmatprep.subr.mxu0 0.0
    %334 = vmatpush1.msra.mxu0 0.0
    %335 = vmatprep.subr.mxu0 0.0
    %336 = vmatpush1.msra.mxu0 0.0
    %337 = vmatprep.subr.mxu0 0.0
    %338 = vmatpush1.msra.mxu0 0.0
    %339 = vmatprep.subr.mxu0 0.0
    %340 = vmatpush1.msra.mxu0 0.0
    %341 = vmatprep.subr.mxu0 0.0
    %342 = vmatpush1.msra.mxu0 0.0
    %343 = vmatprep.subr.mxu0 0.0
    %344 = vmatpush1.msra.mxu0 0.0
    %345 = vmatprep.subr.mxu0 0.0
    %346 = vmatpush1.msra.mxu0 0.0
    %347 = vmatprep.subr.mxu0 0.0
    %348 = vmatpush1.msra.mxu0 0.0
    %349 = vmatprep.subr.mxu0 0.0
    %350 = vmatpush1.msra.mxu0 0.0
    %351 = vmatprep.subr.mxu0 0.0
    %352 = vmatpush1.msra.mxu0 0.0
    %353 = vmatprep.subr.mxu0 0.0
    %354 = vmatpush1.msra.mxu0 0.0
    %355 = vmatprep.subr.mxu0 0.0
    %356 = vmatpush1.msra.mxu0 0.0
    %357 = vmatprep.subr.mxu0 0.0
    %358 = vmatpush1.msra.mxu0 0.0
    %359 = vmatprep.subr.mxu0 0.0
    %360 = vmatpush1.msra.mxu0 0.0
    %361 = vmatprep.subr.mxu0 0.0
    %362 = vmatpush1.msra.mxu0 0.0
    %363 = vmatprep.subr.mxu0 0.0
    %364 = vmatpush1.msra.mxu0 0.0
    %365 = vmatprep.subr.mxu0 0.0
    %366 = vmatpush1.msra.mxu0 0.0
    %367 = vmatprep.subr.mxu0 0.0
    %368 = vmatpush1.msra.mxu0 0.0
    %369 = vmatprep.subr.mxu0 0.0
    %370 = vmatpush1.msra.mxu0 0.0
    %371 = vmatprep.subr.mxu0 0.0
    %372 = vmatpush1.msra.mxu0 0.0
    %373 = vmatprep.subr.mxu0 0.0
    %374 = vmatpush1.msra.mxu0 0.0
    %375 = vmatprep.subr.mxu0 0.0
    %376 = vmatpush1.msra.mxu0 0.0
    %377 = vmatprep.subr.mxu0 0.0
    %378 = vmatpush1.msra.mxu0 0.0
    %379 = vmatprep.subr.mxu0 0.0
    %380 = vmatpush1.msra.mxu0 0.0
    %381 = vmatprep.mubr.f32.mxu0 0.0
    %382 = vmatmul.mubr.f32.gmra.mrb[0].mxu0 %v315
    %v383 = vpop.f32.mrb[0].mxu0
    %v384 = vadd.f32 %v310, %v383
    %v385 = vpop.f32.mrb[0].mxu0
    %386 = vdwg.mxu0
    %388 = vrot.lane.b32.xlu0 %v212, 32
    %v389 = vpop.permute.xlu0 %388
    %392 = vrot.lane.b32.xlu0 %v298, 64
    %v393 = vpop.permute.xlu0 %392
    %396 = vrot.lane.b32.xlu0 %v384, 96
    %v397 = vpop.permute.xlu0 %396
    %vm399 = vcmask 261120
    %v400 = vsel %vm399, %v126, %v389
    %vm401 = vcmask 523264
    %v402 = vsel %vm401, %v400, %v393
    %vm403 = vcmask 785408
    %v404 = vsel %vm403, %v402, %v397
    %405 = vst [vmem:[%s3] sm:$0x3] %v404
    // Predicated region
    $region22: #{block_model_forward.1} parent=1 // pred_check
      _
    $region23: #{block_model_forward.1} parent=1 // pred_check_branch
      %407 = sbr.rel (0) target = $region25
    $region24: #{block_model_forward.1} parent=1 // pred_region
      _
    $region25: #{block_model_forward.1} parent=1 // pred_fallthru
      _
    // Predicated region
    $region26: #{block_model_forward.1} parent=1 // pred_check
      _
    $region27: #{block_model_forward.1} parent=1 // pred_check_branch
      %409 = sbr.rel (0) target = $region29
    $region28: #{block_model_forward.1} parent=1 // pred_region
      _
    $region29: #{block_model_forward.1} parent=1 // pred_fallthru
      _
    %410 = vsyncpa [#allocation3], 1
    %411 = vsyncpa [#allocation5], 1

</llo_original>
